<compile_context>
chip_gen: v7x
topology: tpu7x:2x2x1
jax: 0.10.0
libtpu: 0.0.40
codegen_flags: <defaults>
</compile_context>

<pallas_src>
import functools
import math

import jax
import jax.numpy as jnp
from jax import lax
from jax.experimental import pallas as pl
from jax.experimental.pallas import tpu as pltpu


# ---------------------------------------------------------------------------
# Kernels (per-token losses only; reductions done in the wrapper)
# ---------------------------------------------------------------------------
def _ce_kernel(logits_ref, labels_ref, loss_ref, *, ignore_index):
    """Per-token cross entropy: -log_softmax(logits)[label], 0 at ignore_index."""
    x = logits_ref[...].astype(jnp.float32)                       # (TN, V)
    m = jnp.max(x, axis=-1, keepdims=True)
    lse = jnp.log(jnp.sum(jnp.exp(x - m), axis=-1, keepdims=True)) + m
    logp = x - lse                                                # log-softmax
    labels = labels_ref[...]                                      # (TN, 1) int32
    vocab_ids = lax.broadcasted_iota(jnp.int32, x.shape, 1)
    logp_label = jnp.sum(jnp.where(vocab_ids == labels, logp, 0.0),
                         axis=-1, keepdims=True)                  # (TN, 1)
    valid = (labels != ignore_index).astype(jnp.float32)          # (TN, 1)
    loss_ref[...] = -logp_label * valid


def _kl_kernel(logits_ref, labels_ref, mask_ref, loss_ref, *,
               ignore_index, low_confidence, high_confidence):
    """Label-smoothed KL per token, algebraically reduced.

    model_prob only takes values {0, low_confidence, high_confidence}, so
    sum_v p*(log p - logp) is rewritten with Python-constant logs and row sums
    of logp -- no full (TN, V) transcendental log, no full-width model_prob
    tensor is materialized.
    """
    x = logits_ref[...].astype(jnp.float32)                       # (TN, V)
    V = x.shape[-1]
    m = jnp.max(x, axis=-1, keepdims=True)
    lse = jnp.log(jnp.sum(jnp.exp(x - m), axis=-1, keepdims=True)) + m
    logp = x - lse

    labels = labels_ref[...]                                      # (TN, 1) int32
    vocab_ids = lax.broadcasted_iota(jnp.int32, x.shape, 1)
    logp_label = jnp.sum(jnp.where(vocab_ids == labels, logp, 0.0),
                         axis=-1, keepdims=True)                  # (TN, 1)
    sum_logp = jnp.sum(logp, axis=-1, keepdims=True)              # (TN, 1)

    log_low = math.log(low_confidence) if low_confidence > 0.0 else 0.0
    log_high = math.log(high_confidence) if high_confidence > 0.0 else 0.0

    if ignore_index >= 0:
        logp_ign = jnp.sum(jnp.where(vocab_ids == ignore_index, logp, 0.0),
                           axis=-1, keepdims=True)                # (TN, 1)
        lab_is_ign = (labels == ignore_index)
        # scatter wins over zeroing: if label == ignore_index that column gets
        # high_confidence, so all other V-1 columns are low_confidence.
        n_low = jnp.where(lab_is_ign, jnp.float32(V - 1), jnp.float32(V - 2))
        ign_term = jnp.where(lab_is_ign, jnp.float32(0.0), logp_ign)
    else:
        n_low = jnp.float32(V - 1)
        ign_term = jnp.float32(0.0)

    low_sum_logp = sum_logp - logp_label - ign_term               # sum over low-conf cols
    per = (high_confidence * (log_high - logp_label)
           + low_confidence * (n_low * log_low - low_sum_logp))   # (TN, 1)
    loss_ref[...] = per * mask_ref[...]


# ---------------------------------------------------------------------------
# Tiling helpers
# ---------------------------------------------------------------------------
_BLOCK_BYTES_BUDGET = 4 * 1024 * 1024   # native-dtype logits bytes per block (x2 buffers)
_VMEM_LIMIT_BYTES = 48 * 1024 * 1024    # safe on v7x (64 MiB phys) and raises v5e/v6e default
_MAX_ROWS = 1024


def _round_up(x, m):
    return ((x + m - 1) // m) * m


def _choose_row_tile(n_rows, vocab, itemsize):
    """Largest row tile (multiple of 8) whose logits block fits the byte budget."""
    tn = _BLOCK_BYTES_BUDGET // max(1, vocab * itemsize)
    tn = max(8, min(tn, _MAX_ROWS))
    tn = (tn // 8) * 8
    tn = min(tn, _round_up(n_rows, 8))
    return max(8, tn)


def _sequence_mask(lengths, max_len):
    # mask[b, t] = t < lengths[b]
    t = jnp.arange(max_len, dtype=lengths.dtype)[None, :]
    return t < lengths[:, None]


# ---------------------------------------------------------------------------
# Module wrapper
# ---------------------------------------------------------------------------
class SequenceLossPallas:
    """JAX/Pallas port of the PyTorch SequenceLoss module (forward pass)."""

    def __init__(self, tgt_vocab_size, ignore_index=0, label_smoothing=0.0):
        assert 0.0 <= label_smoothing <= 1.0
        self.tgt_vocab_size = tgt_vocab_size
        self.ignore_index = ignore_index
        self.label_smoothing = float(label_smoothing)
        if self.label_smoothing > 0:
            if self.ignore_index >= 0:
                self.low_confidence = self.label_smoothing / (tgt_vocab_size - 2)
            else:
                self.low_confidence = self.label_smoothing / (tgt_vocab_size - 1)
            self.high_confidence = 1.0 - self.label_smoothing
        else:
            self.low_confidence = None
            self.high_confidence = None

    # ---- pallas launchers -------------------------------------------------
    def _run_ce(self, logits2d, labels2d):
        N, V = logits2d.shape
        tn = _choose_row_tile(N, V, logits2d.dtype.itemsize)
        Np = _round_up(N, tn)
        if Np != N:
            logits2d = jnp.pad(logits2d, ((0, Np - N), (0, 0)))
            labels2d = jnp.pad(labels2d, ((0, Np - N), (0, 0)),
                               constant_values=self.ignore_index)
        kern = functools.partial(_ce_kernel, ignore_index=self.ignore_index)
        # TODO(synk): per-token output kept as (Np, 1) blocks; a lane-dense (1, Np)
        # slab would shave a few % more but is write-side-minor for this kernel.
        per_tok = pl.pallas_call(
            kern,
            out_shape=jax.ShapeDtypeStruct((Np, 1), jnp.float32),
            grid_spec=pltpu.PrefetchScalarGridSpec(
                num_scalar_prefetch=0, grid=(Np // tn,),
                in_specs=[pl.BlockSpec((tn, V), lambda i: (i, 0)),
                          pl.BlockSpec((tn, 1), lambda i: (i, 0))],
                out_specs=pl.BlockSpec((tn, 1), lambda i: (i, 0))),
            compiler_params=pltpu.CompilerParams(
                dimension_semantics=("parallel",),
                vmem_limit_bytes=_VMEM_LIMIT_BYTES),
        )(logits2d, labels2d)
        return per_tok[:N, 0]

    def _run_kl(self, logits2d, labels2d, mask2d):
        N, V = logits2d.shape
        tn = _choose_row_tile(N, V, logits2d.dtype.itemsize)
        Np = _round_up(N, tn)
        if Np != N:
            logits2d = jnp.pad(logits2d, ((0, Np - N), (0, 0)))
            labels2d = jnp.pad(labels2d, ((0, Np - N), (0, 0)),
                               constant_values=self.ignore_index)
            mask2d = jnp.pad(mask2d, ((0, Np - N), (0, 0)))   # pad mask with 0
        kern = functools.partial(_kl_kernel,
                                 ignore_index=self.ignore_index,
                                 low_confidence=self.low_confidence,
                                 high_confidence=self.high_confidence)
        per_tok = pl.pallas_call(
            kern,
            out_shape=jax.ShapeDtypeStruct((Np, 1), jnp.float32),
            grid_spec=pltpu.PrefetchScalarGridSpec(
                num_scalar_prefetch=0, grid=(Np // tn,),
                in_specs=[pl.BlockSpec((tn, V), lambda i: (i, 0)),
                          pl.BlockSpec((tn, 1), lambda i: (i, 0)),
                          pl.BlockSpec((tn, 1), lambda i: (i, 0))],
                out_specs=pl.BlockSpec((tn, 1), lambda i: (i, 0))),
            compiler_params=pltpu.CompilerParams(
                dimension_semantics=("parallel",),
                vmem_limit_bytes=_VMEM_LIMIT_BYTES),
        )(logits2d, labels2d, mask2d)
        return per_tok[:N, 0]

    # ---- public API (mirrors nn.Module.forward) ---------------------------
    def cross_entropy_loss(self, logits, labels, lengths=None):
        V = logits.shape[-1]
        T = labels.shape[-1]
        if self.ignore_index >= 0:
            lab = labels
        else:
            # PyTorch path: labels.masked_fill_(~sequence_mask, -1)
            assert lengths is not None
            oob = ~_sequence_mask(lengths, T)
            lab = jnp.where(oob, jnp.int32(-1), labels.astype(jnp.int32))
        logits2d = logits.reshape(-1, V)                  # native dtype (bf16 stays bf16)
        labels2d = lab.reshape(-1, 1).astype(jnp.int32)
        per_tok = self._run_ce(logits2d, labels2d)
        if lengths is None:
            valid = (labels2d[:, 0] != self.ignore_index).astype(jnp.float32)
            return per_tok.sum() / valid.sum()
        loss_per_step = per_tok.reshape(labels.shape)
        loss = per_tok.sum() / lengths.astype(jnp.float32).sum()
        return loss, loss_per_step

    def kl_loss(self, logits, labels, lengths):
        V = logits.shape[-1]
        T = labels.shape[1]
        logits2d = logits.reshape(-1, V)                  # native dtype
        labels2d = labels.reshape(-1, 1).astype(jnp.int32)
        mask2d = _sequence_mask(lengths, T).astype(jnp.float32).reshape(-1, 1)
        losses = self._run_kl(logits2d, labels2d, mask2d)
        loss = losses.sum() / mask2d.sum()
        return loss, losses

    def __call__(self, logits, labels, lengths=None):
        if self.label_smoothing > 0:
            return self.kl_loss(logits, labels, lengths)
        return self.cross_entropy_loss(logits, labels, lengths)


# ---------------------------------------------------------------------------
# Pure-JAX references (for correctness check only)
# ---------------------------------------------------------------------------
def _ref_ce(logits, labels, lengths, ignore_index):
    V = logits.shape[-1]
    logp = jax.nn.log_softmax(logits.reshape(-1, V).astype(jnp.float32), axis=-1)
    lab = labels.reshape(-1)
    pick = jnp.take_along_axis(logp, lab[:, None], axis=1)[:, 0]
    valid = (lab != ignore_index).astype(jnp.float32)
    per = -pick * valid
    return per.sum() / lengths.astype(jnp.float32).sum(), per.reshape(labels.shape)


def _ref_kl(logits, labels, lengths, ignore_index, low_c, high_c):
    V = logits.shape[-1]
    T = labels.shape[1]
    logp = jax.nn.log_softmax(logits.reshape(-1, V).astype(jnp.float32), axis=-1)
    lab = labels.reshape(-1)
    one_hot = jnp.full((V,), low_c, jnp.float32).at[ignore_index].set(0.0)
    mp = jnp.tile(one_hot[None, :], (lab.shape[0], 1))
    mp = mp.at[jnp.arange(lab.shape[0]), lab].set(high_c)
    pt = jnp.where(mp > 0, mp * (jnp.log(mp) - logp), 0.0)
    mask = _sequence_mask(lengths, T).astype(jnp.float32).reshape(-1)
    losses = pt.sum(1) * mask
    return losses.sum() / mask.sum(), losses


# ---------------------------------------------------------------------------
if __name__ == "__main__":
    B, T, V = 2, 8, 32
    key = jax.random.PRNGKey(0)
    k1, k2, k3, k4 = jax.random.split(key, 4)
    logits = jax.random.normal(k1, (B, T, V), dtype=jnp.float32)
    labels = jax.random.randint(k2, (B, T), 0, V, dtype=jnp.int32)
    lengths = jnp.array([8, 5], dtype=jnp.int32)

    # --- cross-entropy path (label_smoothing = 0) ---
    ce_mod = SequenceLossPallas(tgt_vocab_size=V, ignore_index=0, label_smoothing=0.0)
    ce_loss, ce_per_step = ce_mod(logits, labels, lengths)
    ce_loss = jax.block_until_ready(ce_loss)
    ce_per_step = jax.block_until_ready(ce_per_step)
    ref_loss, ref_per = _ref_ce(logits, labels, lengths, ignore_index=0)
    assert jnp.allclose(ce_loss, ref_loss, atol=1e-5, rtol=1e-5)
    assert jnp.allclose(ce_per_step, ref_per, atol=1e-5, rtol=1e-5)

    # lengths=None path (scalar mean over non-ignored tokens)
    ce_mean = jax.block_until_ready(ce_mod(logits, labels))
    valid = (labels.reshape(-1) != 0).astype(jnp.float32)
    ref_mean = (ref_per.reshape(-1).sum() / valid.sum())
    assert jnp.allclose(ce_mean, ref_mean, atol=1e-5, rtol=1e-5)

    # --- KL / label-smoothing path (label_smoothing = 0.1) ---
    kl_mod = SequenceLossPallas(tgt_vocab_size=V, ignore_index=0, label_smoothing=0.1)
    kl_loss, kl_losses = kl_mod(logits, labels, lengths)
    kl_loss = jax.block_until_ready(kl_loss)
    kl_losses = jax.block_until_ready(kl_losses)
    ref_kloss, ref_klosses = _ref_kl(logits, labels, lengths, 0,
                                     kl_mod.low_confidence, kl_mod.high_confidence)
    assert jnp.allclose(kl_loss, ref_kloss, atol=1e-5, rtol=1e-5)
    assert jnp.allclose(kl_losses, ref_klosses, atol=1e-5, rtol=1e-5)

    # --- bf16 logits + N not a multiple of the row tile (exercises padding) ---
    B2, T2, V2 = 3, 5, 64
    logits_b = jax.random.normal(k3, (B2, T2, V2), dtype=jnp.bfloat16)
    labels_b = jax.random.randint(k4, (B2, T2), 0, V2, dtype=jnp.int32)
    lengths_b = jnp.array([5, 3, 4], dtype=jnp.int32)

    ce2 = SequenceLossPallas(V2, ignore_index=0, label_smoothing=0.0)
    l2, p2 = ce2(logits_b, labels_b, lengths_b)
    l2 = jax.block_until_ready(l2)
    r2, rp2 = _ref_ce(logits_b, labels_b, lengths_b, 0)
    assert jnp.allclose(l2, r2, atol=2e-5, rtol=2e-5)
    assert jnp.allclose(p2, rp2, atol=2e-5, rtol=2e-5)

    kl2 = SequenceLossPallas(V2, ignore_index=0, label_smoothing=0.1)
    kll2, klp2 = kl2(logits_b, labels_b, lengths_b)
    kll2 = jax.block_until_ready(kll2)
    klp2 = jax.block_until_ready(klp2)
    rkl2, rklp2 = _ref_kl(logits_b, labels_b, lengths_b, 0,
                          kl2.low_confidence, kl2.high_confidence)
    assert jnp.allclose(kll2, rkl2, atol=2e-5, rtol=2e-5)
    assert jnp.allclose(klp2, rklp2, atol=2e-5, rtol=2e-5)

    print("KERNEL_OK")
</pallas_src>

<mosaic_0001>
module attributes {stable_mosaic.version = 11 : i64} {
  func.func @_ce_kernel(%arg0: i32, %arg1: memref<16x32xf32, #tpu.memory_space<vmem>>, %arg2: memref<16x1xi32, #tpu.memory_space<vmem>>, %arg3: memref<16x1xf32, #tpu.memory_space<vmem>>) attributes {dimension_semantics = [#tpu.dimension_semantics<parallel>], iteration_bounds = array<i64: 1>, scalar_prefetch = 0 : i64, scratch_operands = 0 : i64, tpu.core_type = #tpu.core_type<tc>, window_params = [{transform_indices = @transform_0, window_bounds = array<i64: 16, 32>}, {transform_indices = @transform_1, window_bounds = array<i64: 16, 1>}, {transform_indices = @transform_2, window_bounds = array<i64: 16, 1>}]} {
    %c0 = arith.constant 0 : index
    %c0_0 = arith.constant 0 : index
    %0 = vector.load %arg1[%c0, %c0_0] : memref<16x32xf32, #tpu.memory_space<vmem>>, vector<16x32xf32>
    %cst = arith.constant dense<0xFF800000> : vector<16xf32>
    %1 = vector.multi_reduction <maximumf>, %0, %cst [1] : vector<16x32xf32> to vector<16xf32>
    %2 = vector.shape_cast %1 : vector<16xf32> to vector<16x1xf32>
    %3 = vector.broadcast %2 : vector<16x1xf32> to vector<16x32xf32>
    %4 = arith.subf %0, %3 : vector<16x32xf32>
    %5 = math.exp %4 : vector<16x32xf32>
    %cst_1 = arith.constant dense<0.000000e+00> : vector<16xf32>
    %6 = vector.multi_reduction <add>, %5, %cst_1 [1] : vector<16x32xf32> to vector<16xf32>
    %7 = vector.shape_cast %6 : vector<16xf32> to vector<16x1xf32>
    %8 = math.log %7 : vector<16x1xf32>
    %9 = arith.addf %8, %2 : vector<16x1xf32>
    %10 = vector.broadcast %9 : vector<16x1xf32> to vector<16x32xf32>
    %11 = arith.subf %0, %10 : vector<16x32xf32>
    %c0_2 = arith.constant 0 : index
    %c0_3 = arith.constant 0 : index
    %12 = vector.load %arg2[%c0_2, %c0_3] : memref<16x1xi32, #tpu.memory_space<vmem>>, vector<16x1xi32>
    %13 = tpu.iota {dimensions = array<i32: 1>} : vector<16x32xi32>
    %14 = vector.broadcast %12 : vector<16x1xi32> to vector<16x32xi32>
    %15 = arith.cmpi eq, %13, %14 : vector<16x32xi32>
    %cst_4 = arith.constant 0.000000e+00 : f32
    %16 = vector.broadcast %cst_4 : f32 to vector<16x32xf32>
    %17 = arith.select %15, %11, %16 : vector<16x32xi1>, vector<16x32xf32>
    %cst_5 = arith.constant dense<0.000000e+00> : vector<16xf32>
    %18 = vector.multi_reduction <add>, %17, %cst_5 [1] : vector<16x32xf32> to vector<16xf32>
    %19 = vector.shape_cast %18 : vector<16xf32> to vector<16x1xf32>
    %c0_i32 = arith.constant 0 : i32
    %20 = vector.broadcast %c0_i32 : i32 to vector<16x1xi32>
    %21 = arith.cmpi ne, %12, %20 : vector<16x1xi32>
    %22 = arith.extui %21 : vector<16x1xi1> to vector<16x1xi32>
    %23 = arith.sitofp %22 : vector<16x1xi32> to vector<16x1xf32>
    %cst_6 = arith.constant 0.000000e+00 : f32
    %24 = vector.broadcast %cst_6 : f32 to vector<16x1xf32>
    %25 = arith.subf %24, %19 : vector<16x1xf32>
    %26 = arith.mulf %25, %23 : vector<16x1xf32>
    %c0_7 = arith.constant 0 : index
    %c0_8 = arith.constant 0 : index
    %27 = vector.load %arg3[%c0_7, %c0_8] : memref<16x1xf32, #tpu.memory_space<vmem>>, vector<16x1xf32>
    tpu.vector_store %arg3[%c0_7, %c0_8], %26 {strides = array<i32>} : memref<16x1xf32, #tpu.memory_space<vmem>>, vector<16x1xf32>,
    return
  }
  func.func @transform_0(%arg0: i32) -> (i32, i32) {
    %c0_i32 = arith.constant 0 : i32
    %c0_i32_0 = arith.constant 0 : i32
    return %arg0, %c0_i32 : i32, i32
  }
  func.func @transform_1(%arg0: i32) -> (i32, i32) {
    %c0_i32 = arith.constant 0 : i32
    %c0_i32_0 = arith.constant 0 : i32
    return %arg0, %c0_i32 : i32, i32
  }
  func.func @transform_2(%arg0: i32) -> (i32, i32) {
    %c0_i32 = arith.constant 0 : i32
    %c0_i32_0 = arith.constant 0 : i32
    return %arg0, %c0_i32 : i32, i32
  }
}

</mosaic_0001>

<llo_original>
// kernel: tpu_custom_call.1
$region0: #{tpu_custom_call.1}
  #allocation0 [shape = 'u32[]', space=smem, size = 0x4, offset = 0x4, fixed_abs, tag = 'smem constant byte address 0x4 - core index']
  #allocation1 [shape = 'u32[144,128]{1,0:T(1,128)}', space=vmem, size = 0x12000, scoped, tag = 'internal scratch']
  %s0 = inlined_call_operand.vmem [shape: f32[16,32], index: 0, kind: input, shape index: {}]
  %s1 = inlined_call_operand.vmem [shape: s32[16,1], index: 1, kind: input, shape index: {}]
  %s2 = inlined_call_operand.vmem [shape: f32[16,1], index: 2, kind: output, shape index: {}]
  %s3 = sld [smem:[#allocation0]]
  $region18: #{tpu_custom_call.1} parent=0
    _
  %s5 = ssub.s32 1, %s3
  %s6 = scalar_select 0, %s5, %s3
  // Predicated region
  $region2: #{tpu_custom_call.1} parent=0 // pred_check
    _
  $region3: #{tpu_custom_call.1} parent=0 // pred_check_branch
    %8 = sbr.rel (0) target = $region5
  $region4: #{tpu_custom_call.1} parent=0 // pred_region
    _
  $region5: #{tpu_custom_call.1} parent=0 // pred_fallthru
    _
  // Predicated region
  $region6: #{tpu_custom_call.1} parent=0 // pred_check
    _
  $region7: #{tpu_custom_call.1} parent=0 // pred_check_branch
    %10 = sbr.rel (0) target = $region9
  $region8: #{tpu_custom_call.1} parent=0 // pred_region
    _
  $region9: #{tpu_custom_call.1} parent=0 // pred_fallthru
    _
  %v11 = vld [vmem:[%s0] sm:$0xff]
  %v12 = vld [vmem:[%s0 + $0x8] sm:$0xff]
  %vm13 = vcmask 261120
  %v14 = vsel %vm13, %v11, -inf
  %15 = vmax.xlane.f32.xlu0 %v14
  %v16 = vpop.xlane.xlu0 %15
  %v17 = vsel %vm13, %v12, -inf
  %18 = vmax.xlane.f32.xlu0 %v17
  %v19 = vpop.xlane.xlu0 %18
  %v20 = vsub.f32 %v11, %v16
  %v21 = vsub.f32 %v12, %v19
  %v22 = vmul.f32 %v20, 1.442695
  %v23 = vpow.pop %v22
  %v24 = vmul.f32 %v21, 1.442695
  %v25 = vpow.pop %v24
  %v26 = vsel %vm13, %v23, 0.0
  %27 = vadd.xlane.f32.xlu0 %v26
  %v28 = vpop.xlane.xlu0 %27
  %v29 = vsel %vm13, %v25, 0.0
  %30 = vadd.xlane.f32.xlu0 %v29
  %v31 = vpop.xlane.xlu0 %30
  %v32 = vlog2.pop %v28
  %v33 = vmul.f32 %v32, 0.6931472
  %v34 = vlog2.pop %v31
  %v35 = vmul.f32 %v34, 0.6931472
  %v36 = vadd.f32 %v33, %v16
  %v37 = vadd.f32 %v35, %v19
  %v38 = vsub.f32 %v11, %v36
  %v39 = vsub.f32 %v12, %v37
  %v40 = vld [vmem:[%s1] sm:$0xff]
  %v41 = vld [vmem:[%s1 + $0x8] sm:$0xff]
  %v42 = vlaneseq
  %v43 = vand.u32 %v42, 127
  %44 = vset.pattern.permute.xlu0 0
  %45 = vperm.xlu0 %44, %v40
  %v46 = vpop.permute.xlu0 %45
  %47 = vset.pattern.permute.xlu0 0
  %48 = vperm.xlu0 %47, %v41
  %v49 = vpop.permute.xlu0 %48
  %vm50 = vcmp.eq.s32.totalorder %v43, %v46
  %vm51 = vcmp.eq.s32.totalorder %v43, %v49
  %v52 = vsel %vm50, %v38, 0.0
  %v53 = vsel %vm51, %v39, 0.0
  %v54 = vsel %vm13, %v52, 0.0
  %55 = vadd.xlane.f32.xlu0 %v54
  %v56 = vpop.xlane.xlu0 %55
  %v57 = vsel %vm13, %v53, 0.0
  %58 = vadd.xlane.f32.xlu0 %v57
  %v59 = vpop.xlane.xlu0 %58
  %vm60 = vcmp.ne.s32.totalorder %v40, 0
  %vm61 = vcmp.ne.s32.totalorder %v41, 0
  %v62 = vsel %vm60, 1, 0
  %v63 = vsel %vm61, 1, 0
  %v64 = vcvt.s32.f32 %v62
  %v65 = vcvt.s32.f32 %v63
  %v66 = vsub.f32 0.0, %v56
  %v67 = vsub.f32 0.0, %v59
  %v68 = vmul.f32 %v66, %v64
  %v69 = vmul.f32 %v67, %v65
  %vm70 = vcmask 7168
  %71 = vst.msk [vmem:[%s2] sm:$0xff] %vm70, %v68
  %72 = vst.msk [vmem:[%s2 + $0x8] sm:$0xff] %vm70, %v69
  // Predicated region
  $region10: #{tpu_custom_call.1} parent=0 // pred_check
    _
  $region11: #{tpu_custom_call.1} parent=0 // pred_check_branch
    %74 = sbr.rel (0) target = $region13
  $region12: #{tpu_custom_call.1} parent=0 // pred_region
    _
  $region13: #{tpu_custom_call.1} parent=0 // pred_fallthru
    _
  // Predicated region
  $region14: #{tpu_custom_call.1} parent=0 // pred_check
    _
  $region15: #{tpu_custom_call.1} parent=0 // pred_check_branch
    %76 = sbr.rel (0) target = $region17
  $region16: #{tpu_custom_call.1} parent=0 // pred_region
    _
  $region17: #{tpu_custom_call.1} parent=0 // pred_fallthru
    _

</llo_original>
